<compile_context>
chip_gen: v5e
topology: v5e:2x2
jax: 0.10.0
libtpu: 0.0.40
codegen_flags: <defaults>
</compile_context>

<pallas_src>
import math

import jax
import jax.numpy as jnp
from jax import lax
from jax.experimental import pallas as pl
from jax.experimental.pallas import tpu as pltpu


def _round_up(x: int, m: int) -> int:
    return ((x + m - 1) // m) * m


def _num_tensorcores_per_chip() -> int:
    """2 TensorCores on v7x; 1 on v5e/v6e (and default if detection fails)."""
    try:
        kind = jax.devices()[0].device_kind.lower()
    except Exception:
        return 1
    return 2 if "v7" in kind else 1


def _make_kernel(dim: int, half_dim: int, fold: int, scale: float):
    width = fold * dim
    half_pi = math.pi / 2.0

    def kernel(t_ref, o_ref):
        # t_ref: (block_r, fold) int32    -- `fold` packed time indices per folded row
        # o_ref: (block_r, width) f32/bf16 -- lane-dense output slab (width % 128 == 0)
        tr = o_ref.shape[0]

        # Per-lane metadata on a single (1, width) row (constant across batch rows);
        # one EUP exp vreg-row per grid step -- effectively free.
        lane = lax.broadcasted_iota(jnp.int32, (1, width), 1)
        j = lane % dim                                 # column within one embedding row
        is_cos = j >= half_dim                         # second half of each row -> cos
        freq_idx = jnp.where(is_cos, j - half_dim, j)
        freq = jnp.exp(freq_idx.astype(jnp.float32) * (-scale))            # (1, width)
        # Phase trick: cos(x) = sin(x + pi/2) -> a single sin over the full width.
        phase = jnp.where(is_cos, jnp.float32(half_pi), jnp.float32(0.0))  # (1, width)

        # Broadcast each packed time column across its `dim` lanes (pure lane
        # broadcast + one concat; no gather, no MXU).
        # TODO(synk): if a bundle dump ever shows this concat binding VALU/XLU slots,
        # route the replication through a constant (fold x width) selector matmul.
        t = t_ref[...].astype(jnp.float32)             # exact for time < 2^24
        parts = [jnp.broadcast_to(t[:, g:g + 1], (tr, dim)) for g in range(fold)]
        t_lanes = parts[0] if fold == 1 else jnp.concatenate(parts, axis=-1)

        args = t_lanes * freq + phase                  # (tr, width) VPU broadcast FMA
        # Single transcendental + single unmasked full-width store.
        o_ref[...] = jnp.sin(args).astype(o_ref.dtype)

    return kernel


def sinusoidal_position_embeddings(time, dim, *, timesteps=200, max_block_rows=2048,
                                   out_dtype=jnp.float32):
    """Pallas equivalent of SinusoidalPositionEmbeddings(dim, timesteps)(time)."""
    # `timesteps` only bounds valid indices of the torch lookup table; for valid
    # integer indices the on-the-fly values are identical to the table rows.
    # TODO(synk): torch raises on time >= timesteps / negative time; here such
    # indices are silently computed instead of bounds-checked.
    del timesteps

    assert dim % 2 == 0, "dim must be even"
    half_dim = dim // 2
    # half_dim == 1 would divide by zero in the torch module too; guard it here.
    scale = math.log(10000.0) / max(half_dim - 1, 1)

    b = int(time.shape[0])
    # Lane-dense folding: pack `fold` consecutive batch rows into the lane axis so the
    # output last dim is always a multiple of 128 (unmasked vst on every generation).
    fold = 128 // math.gcd(dim, 128)
    width = fold * dim

    rows = -(-b // fold)                               # folded rows actually needed
    rows8 = _round_up(rows, 8)

    # Cap the row tile so input + double-buffered output stay comfortably in VMEM
    # (block_r*width*4 B per output buffer; 2048x128 f32 = 1 MiB -- tiny everywhere).
    vmem_row_cap = max(8, (((8 << 20) // (width * 4)) // 8) * 8)
    block_cap = max(8, min(max_block_rows, vmem_row_cap))

    # Grid steps: one step unless the tile cap forces more, or the chip has 2
    # TensorCores AND each core would get >= ~256 folded rows of real work.
    n_steps = max(1, -(-rows8 // block_cap))
    if _num_tensorcores_per_chip() >= 2 and rows8 >= 512:
        n_steps = max(n_steps, 2)
    block_r = _round_up(-(-rows8 // n_steps), 8)
    rows_pad = block_r * n_steps                       # == rows8 when rows8 % (8*n_steps) == 0
    b_pad = rows_pad * fold

    t = time.astype(jnp.int32)
    if b_pad != b:
        t = jnp.pad(t, (0, b_pad - b))                 # padded rows computed, then dropped
    t_folded = t.reshape(rows_pad, fold)               # contiguous view (layout plumbing)

    out_folded = pl.pallas_call(
        _make_kernel(dim, half_dim, fold, scale),
        out_shape=jax.ShapeDtypeStruct((rows_pad, width), out_dtype),
        grid_spec=pltpu.PrefetchScalarGridSpec(
            num_scalar_prefetch=0,
            grid=(n_steps,),
            in_specs=[pl.BlockSpec((block_r, fold), lambda i: (i, 0))],
            out_specs=pl.BlockSpec((block_r, width), lambda i: (i, 0)),
        ),
        compiler_params=pltpu.CompilerParams(
            dimension_semantics=("parallel",),
        ),
    )(t_folded)

    # Zero-copy reshape when b == b_pad; otherwise the [:b] slice may copy -- the
    # wrapper minimizes padding so the aligned common case stays copy-free.
    out = out_folded.reshape(b_pad, dim)
    return out if b_pad == b else out[:b]


def _reference(time, dim, timesteps=200):
    """Pure-JAX mirror of the PyTorch module (table build + gather)."""
    half_dim = dim // 2
    scale = math.log(10000.0) / max(half_dim - 1, 1)
    freqs = jnp.exp(jnp.arange(half_dim, dtype=jnp.float32) * -scale)
    vtime = jnp.arange(timesteps, dtype=jnp.float32)
    emb = vtime[:, None] * freqs[None, :]
    table = jnp.concatenate([jnp.sin(emb), jnp.cos(emb)], axis=-1)
    return table[time, :]


if __name__ == "__main__":
    key = jax.random.PRNGKey(0)
    k1, k2, k3 = jax.random.split(key, 3)

    # Phase trick (cos(x) = sin(x + pi/2)) adds ~1 ulp of f32 argument rounding for
    # args up to ~200, so use a slightly looser (still tight) tolerance.
    ATOL, RTOL = 5e-5, 1e-5

    # Case 1: dim divides 128 -> fold = 4, single grid step, no padding.
    DIM1, B1, T1 = 32, 64, 200
    time1 = jax.random.randint(k1, (B1,), 0, T1, dtype=jnp.int32)
    out1 = jax.block_until_ready(sinusoidal_position_embeddings(time1, DIM1, timesteps=T1))
    ref1 = _reference(time1, DIM1, T1)
    assert out1.shape == (B1, DIM1), out1.shape
    assert out1.dtype == jnp.float32, out1.dtype
    assert jnp.allclose(out1, ref1, atol=ATOL, rtol=RTOL), "mismatch (dim=32)"

    # Case 2: dim = 48 (not a divisor of 128) -> generalized fold = 8, width = 384,
    # lane-dense stores, batch padded.
    DIM2, B2, T2 = 48, 10, 200
    time2 = jax.random.randint(k2, (B2,), 0, T2, dtype=jnp.int32)
    out2 = jax.block_until_ready(sinusoidal_position_embeddings(time2, DIM2, timesteps=T2))
    ref2 = _reference(time2, DIM2, T2)
    assert out2.shape == (B2, DIM2), out2.shape
    assert out2.dtype == jnp.float32, out2.dtype
    assert jnp.allclose(out2, ref2, atol=ATOL, rtol=RTOL), "mismatch (dim=48)"

    # Case 3: dim = 128 -> fold = 1, batch needs padding to a multiple of 8.
    DIM3, B3, T3 = 128, 10, 200
    time3 = jax.random.randint(k3, (B3,), 0, T3, dtype=jnp.int32)
    out3 = jax.block_until_ready(sinusoidal_position_embeddings(time3, DIM3, timesteps=T3))
    ref3 = _reference(time3, DIM3, T3)
    assert out3.shape == (B3, DIM3), out3.shape
    assert out3.dtype == jnp.float32, out3.dtype
    assert jnp.allclose(out3, ref3, atol=ATOL, rtol=RTOL), "mismatch (dim=128)"

    print("KERNEL_OK")
</pallas_src>

<mosaic_0001>
module attributes {stable_mosaic.version = 11 : i64} {
  func.func @kernel(%arg0: i32, %arg1: memref<16x4xi32, #tpu.memory_space<vmem>>, %arg2: memref<16x128xf32, #tpu.memory_space<vmem>>) attributes {dimension_semantics = [#tpu.dimension_semantics<parallel>], iteration_bounds = array<i64: 1>, scalar_prefetch = 0 : i64, scratch_operands = 0 : i64, tpu.core_type = #tpu.core_type<tc>, window_params = [{transform_indices = @transform_0, window_bounds = array<i64: 16, 4>}, {transform_indices = @transform_1, window_bounds = array<i64: 16, 128>}]} {
    %0 = tpu.iota {dimensions = array<i32: 1>} : vector<1x128xi32>
    %c32_i32 = arith.constant 32 : i32
    %c0_i32 = arith.constant 0 : i32
    %1 = arith.cmpi eq, %c32_i32, %c0_i32 : i32
    %c1_i32 = arith.constant 1 : i32
    %2 = arith.select %1, %c1_i32, %c32_i32 : i32
    %3 = vector.broadcast %2 : i32 to vector<1x128xi32>
    %4 = arith.remsi %0, %3 : vector<1x128xi32>
    %c0_i32_0 = arith.constant 0 : i32
    %5 = vector.broadcast %c0_i32_0 : i32 to vector<1x128xi32>
    %6 = arith.cmpi ne, %4, %5 : vector<1x128xi32>
    %c0_i32_1 = arith.constant 0 : i32
    %7 = vector.broadcast %c0_i32_1 : i32 to vector<1x128xi32>
    %8 = arith.cmpi slt, %4, %7 : vector<1x128xi32>
    %c0_i32_2 = arith.constant 0 : i32
    %9 = arith.cmpi slt, %2, %c0_i32_2 : i32
    %10 = vector.broadcast %9 : i1 to vector<1x128xi1>
    %11 = vector.broadcast %10 : vector<1x128xi1> to vector<1x128xi1>
    %12 = arith.xori %8, %11 : vector<1x128xi1>
    %13 = arith.andi %12, %6 : vector<1x128xi1>
    %14 = vector.broadcast %2 : i32 to vector<1x128xi32>
    %15 = arith.addi %4, %14 : vector<1x128xi32>
    %16 = arith.select %13, %15, %4 : vector<1x128xi1>, vector<1x128xi32>
    %c16_i32 = arith.constant 16 : i32
    %17 = vector.broadcast %c16_i32 : i32 to vector<1x128xi32>
    %18 = arith.cmpi sge, %16, %17 : vector<1x128xi32>
    %c16_i32_3 = arith.constant 16 : i32
    %19 = vector.broadcast %c16_i32_3 : i32 to vector<1x128xi32>
    %20 = arith.subi %16, %19 : vector<1x128xi32>
    %21 = arith.select %18, %20, %16 : vector<1x128xi1>, vector<1x128xi32>
    %22 = arith.sitofp %21 : vector<1x128xi32> to vector<1x128xf32>
    %cst = arith.constant -0.614022672 : f32
    %23 = vector.broadcast %cst : f32 to vector<1x128xf32>
    %24 = arith.mulf %22, %23 : vector<1x128xf32>
    %25 = math.exp %24 : vector<1x128xf32>
    %cst_4 = arith.constant 1.57079637 : f32
    %cst_5 = arith.constant 0.000000e+00 : f32
    %26 = vector.broadcast %cst_4 : f32 to vector<1x128xf32>
    %27 = vector.broadcast %cst_5 : f32 to vector<1x128xf32>
    %28 = arith.select %18, %26, %27 : vector<1x128xi1>, vector<1x128xf32>
    %c0 = arith.constant 0 : index
    %c0_6 = arith.constant 0 : index
    %29 = vector.load %arg1[%c0, %c0_6] : memref<16x4xi32, #tpu.memory_space<vmem>>, vector<16x4xi32>
    %30 = arith.sitofp %29 : vector<16x4xi32> to vector<16x4xf32>
    %31 = vector.extract_strided_slice %30 {offsets = [0, 0], sizes = [16, 1], strides = [1, 1]} : vector<16x4xf32> to vector<16x1xf32>
    %32 = vector.shape_cast %31 : vector<16x1xf32> to vector<16x1xf32>
    %33 = vector.broadcast %32 : vector<16x1xf32> to vector<16x32xf32>
    %34 = vector.extract_strided_slice %30 {offsets = [0, 1], sizes = [16, 1], strides = [1, 1]} : vector<16x4xf32> to vector<16x1xf32>
    %35 = vector.shape_cast %34 : vector<16x1xf32> to vector<16x1xf32>
    %36 = vector.broadcast %35 : vector<16x1xf32> to vector<16x32xf32>
    %37 = vector.extract_strided_slice %30 {offsets = [0, 2], sizes = [16, 1], strides = [1, 1]} : vector<16x4xf32> to vector<16x1xf32>
    %38 = vector.shape_cast %37 : vector<16x1xf32> to vector<16x1xf32>
    %39 = vector.broadcast %38 : vector<16x1xf32> to vector<16x32xf32>
    %40 = vector.extract_strided_slice %30 {offsets = [0, 3], sizes = [16, 1], strides = [1, 1]} : vector<16x4xf32> to vector<16x1xf32>
    %41 = vector.shape_cast %40 : vector<16x1xf32> to vector<16x1xf32>
    %42 = vector.broadcast %41 : vector<16x1xf32> to vector<16x32xf32>
    %43 = tpu.concatenate %33, %36, %39, %42 in 1 : vector<16x32xf32>, vector<16x32xf32>, vector<16x32xf32>, vector<16x32xf32> -> vector<16x128xf32>
    %44 = vector.broadcast %25 : vector<1x128xf32> to vector<16x128xf32>
    %45 = arith.mulf %43, %44 : vector<16x128xf32>
    %46 = vector.broadcast %28 : vector<1x128xf32> to vector<16x128xf32>
    %47 = arith.addf %45, %46 : vector<16x128xf32>
    %48 = math.sin %47 : vector<16x128xf32>
    %c0_7 = arith.constant 0 : index
    %c0_8 = arith.constant 0 : index
    %49 = vector.load %arg2[%c0_7, %c0_8] : memref<16x128xf32, #tpu.memory_space<vmem>>, vector<16x128xf32>
    tpu.vector_store %arg2[%c0_7, %c0_8], %48 {strides = array<i32>} : memref<16x128xf32, #tpu.memory_space<vmem>>, vector<16x128xf32>,
    return
  }
  func.func @transform_0(%arg0: i32) -> (i32, i32) {
    %c0_i32 = arith.constant 0 : i32
    %c0_i32_0 = arith.constant 0 : i32
    return %arg0, %c0_i32 : i32, i32
  }
  func.func @transform_1(%arg0: i32) -> (i32, i32) {
    %c0_i32 = arith.constant 0 : i32
    %c0_i32_0 = arith.constant 0 : i32
    return %arg0, %c0_i32 : i32, i32
  }
}

</mosaic_0001>

<llo_original>
// kernel: tpu_custom_call.1
$region0: #{tpu_custom_call.1}
  #allocation0 [shape = 'u32[]', space=smem, size = 0x4, offset = 0x4, fixed_abs, tag = 'smem constant byte address 0x4 - core index']
  #allocation1 [shape = 'u32[72,128]{1,0:T(1,128)}', space=vmem, size = 0x9000, scoped, tag = 'internal scratch']
  %s0 = inlined_call_operand.vmem [shape: s32[16,4], index: 0, kind: input, shape index: {}]
  %s1 = inlined_call_operand.hbm [shape: f32[16,128], index: 1, kind: output, shape index: {}]
  %s2 = sld [smem:[#allocation0]]
  $region14: #{tpu_custom_call.1} parent=0
    _
  %s4 = ssub.s32 1, %s2
  %s5 = scalar_select 0, %s4, %s2
  $region1: #{tpu_custom_call.1} parent=0
    #allocation2 [shape = 'u8[8192]{0}', space=vmem, size = 0x2000, scoped, tag = 'output window, operand 0, single buffered']
    #allocation3 [shape = 's32[1]{0}', space=sflag, size = 0x4, scoped, tag = 'scoped memory for tpu_custom_call.1']
    %6 = vsyncpa [#allocation3], 0
    // Predicated region
    $region2: #{tpu_custom_call.1} parent=1 // pred_check
      _
    $region3: #{tpu_custom_call.1} parent=1 // pred_check_branch
      %8 = sbr.rel (0) target = $region5
    $region4: #{tpu_custom_call.1} parent=1 // pred_region
      _
    $region5: #{tpu_custom_call.1} parent=1 // pred_fallthru
      _
    %v9 = vlaneseq
    %v10 = vand.u32 %v9, 127
    %vm11 = vcmp.lt.s32.totalorder %v10, 0
    %v12 = vsub.s32 0, %v10
    %v13 = vsel %vm11, %v12, %v10
    %v14 = vshrl.u32 %v13, 5
    %v15 = vand.u32 %v13, 31
    %v16 = vsub.s32 0, %v15
    %v17 = vsel %vm11, %v16, %v15
    %vm18 = vcmp.ne.s32.totalorder %v17, 0
    %vm19 = vcmp.lt.s32.totalorder %v17, 0
    %vm20 = vmand %vm19, %vm18
    %v21 = vadd.s32 %v17, 32
    %v22 = vsel %vm20, %v21, %v17
    %vm23 = vcmp.ge.s32.totalorder %v22, 16
    %v24 = vsub.s32 %v22, 16
    %v25 = vsel %vm23, %v24, %v22
    %v26 = vcvt.s32.f32 %v25
    %v27 = vmul.f32 %v26, -0.6140227
    %v28 = vmul.f32 %v27, 1.442695
    %v29 = vpow.pop %v28
    %v30 = vsel %vm23, 1.5707964, 0.0
    %v31 = vld [vmem:[%s0] sm:$0xff]
    %v32 = vld [vmem:[%s0 + $0x8] sm:$0xff]
    %v33 = vcvt.s32.f32 %v31
    %v34 = vcvt.s32.f32 %v32
    %36 = vset.pattern.permute.xlu0 0
    %37 = vperm.xlu0 %36, %v33
    %v38 = vpop.permute.xlu0 %37
    %41 = vset.pattern.permute.xlu0 0
    %42 = vperm.xlu0 %41, %v34
    %v43 = vpop.permute.xlu0 %42
    %45 = vset.pattern.permute.xlu0 1
    %46 = vperm.xlu0 %45, %v33
    %v47 = vpop.permute.xlu0 %46
    %49 = vset.pattern.permute.xlu0 1
    %50 = vperm.xlu0 %49, %v34
    %v51 = vpop.permute.xlu0 %50
    %53 = vset.pattern.permute.xlu0 2
    %54 = vperm.xlu0 %53, %v33
    %v55 = vpop.permute.xlu0 %54
    %57 = vset.pattern.permute.xlu0 2
    %58 = vperm.xlu0 %57, %v34
    %v59 = vpop.permute.xlu0 %58
    %61 = vset.pattern.permute.xlu0 3
    %62 = vperm.xlu0 %61, %v33
    %v63 = vpop.permute.xlu0 %62
    %65 = vset.pattern.permute.xlu0 3
    %66 = vperm.xlu0 %65, %v34
    %v67 = vpop.permute.xlu0 %66
    %vm69 = vcmask 261120
    %v70 = vsel %vm69, %v38, %v47
    %v71 = vsel %vm69, %v43, %v51
    %vm72 = vcmask 523264
    %v73 = vsel %vm72, %v70, %v55
    %v74 = vsel %vm72, %v71, %v59
    %vm75 = vcmask 785408
    %v76 = vsel %vm75, %v73, %v63
    %v77 = vsel %vm75, %v74, %v67
    %v78 = vmul.f32 %v76, %v29
    %v79 = vmul.f32 %v77, %v29
    %v80 = vadd.f32 %v78, %v30
    %v81 = vadd.f32 %v79, %v30
    %v82 = vand.u32 2147483647, %v80
    %vm83 = vcmp.le.f32.partialorder %v82, 0.7853982
    %vm84 = vcmp.lt.s32.totalorder %v80, 0
    %v85 = vand.u32 %v80, 2139095040
    %v86 = vshrl.u32 %v85, 23
    %v87 = vsub.s32 %v86, 127
    %v88 = vand.u32 2147483647, %v80
    %v89 = vand.u32 %v88, 8388607
    %v90 = vor.u32 %v89, 8388608
    %v91 = vsub.s32 0, %v90
    %v92 = vadd.s32 %v87, 1
    %vm93 = vcmp.gt.s32.totalorder %v92, 0
    %v94 = vsel %vm93, %v92, 0
    %v95 = vshrl.u32 %v94, 5
    %v96 = vand.u32 %v94, 31
    %v97 = vsub.s32 32, %v96
    %v98 = vshrl.u32 683565275, %v97
    %v99 = vshll.u32 683565275, %v96
    %v100 = vshrl.u32 2475754826, %v97
    %v101 = vor.u32 %v99, %v100
    %v102 = vshll.u32 2475754826, %v96
    %v103 = vshrl.u32 2131351028, %v97
    %v104 = vor.u32 %v102, %v103
    %v105 = vshll.u32 2131351028, %v96
    %v106 = vshrl.u32 2102212464, %v97
    %v107 = vor.u32 %v105, %v106
    %v108 = vshll.u32 2102212464, %v96
    %v109 = vshrl.u32 920167782, %v97
    %v110 = vor.u32 %v108, %v109
    %v111 = vshll.u32 920167782, %v96
    %v112 = vshrl.u32 1326507024, %v97
    %v113 = vor.u32 %v111, %v112
    %vm114 = vcmp.lt.s32.totalorder %v95, 1
    %vm115 = vcmp.lt.s32.totalorder %v95, 2
    %vm116 = vcmp.lt.s32.totalorder %v95, 3
    %vm117 = vcmp.lt.s32.totalorder %v95, 4
    %v118 = vsel %vm114, %v98, %v101
    %v119 = vsel %vm117, %v107, 2102212464
    %v120 = vsel %vm116, %v104, %v119
    %v121 = vsel %vm115, %v118, %v120
    %v122 = vsel %vm114, %v101, %v104
    %v123 = vsel %vm117, %v110, 920167782
    %v124 = vsel %vm116, %v107, %v123
    %v125 = vsel %vm115, %v122, %v124
    %v126 = vsel %vm114, %v104, %v107
    %v127 = vsel %vm117, %v113, 1326507024
    %v128 = vsel %vm116, %v110, %v127
    %v129 = vsel %vm115, %v126, %v128
    %v130 = vshll.u32 %v90, 8
    %v131 = vand.u32 %v130, 65535
    %v132 = vshrl.u32 %v130, 16
    %v133 = vand.u32 %v129, 65535
    %v134 = vshrl.u32 %v129, 16
    %v135 = vmul.u32 %v131, %v133
    %v136 = vmul.u32 %v131, %v134
    %v137 = vmul.u32 %v132, %v133
    %v138 = vmul.u32 %v132, %v134
    %v139 = vshll.u32 %v136, 16
    %v140 = vshrl.u32 %v136, 16
    %v141 = vshll.u32 %v137, 16
    %v142 = vshrl.u32 %v137, 16
    %vm143 = vc.u32 %v135, %v139
    %v144 = vsel %vm143, 1, 0
    %v145 = vadd.s32 %v135, %v139
    %v146 = vadd.s32 %v138, %v144
    %vm147 = vc.u32 %v145, %v141
    %v148 = vsel %vm147, 1, 0
    %v149 = vadd.s32 %v145, %v141
    %v150 = vadd.s32 %v146, %v148
    %v151 = vadd.s32 %v150, %v140
    %v152 = vadd.s32 %v151, %v142
    %v153 = vand.u32 %v130, 65535
    %v154 = vshrl.u32 %v130, 16
    %v155 = vand.u32 %v125, 65535
    %v156 = vshrl.u32 %v125, 16
    %v157 = vmul.u32 %v153, %v155
    %v158 = vmul.u32 %v153, %v156
    %v159 = vmul.u32 %v154, %v155
    %v160 = vmul.u32 %v154, %v156
    %v161 = vshll.u32 %v158, 16
    %v162 = vshrl.u32 %v158, 16
    %v163 = vshll.u32 %v159, 16
    %v164 = vshrl.u32 %v159, 16
    %vm165 = vc.u32 %v157, %v161
    %v166 = vsel %vm165, 1, 0
    %v167 = vadd.s32 %v157, %v161
    %v168 = vadd.s32 %v160, %v166
    %vm169 = vc.u32 %v167, %v163
    %v170 = vsel %vm169, 1, 0
    %v171 = vadd.s32 %v167, %v163
    %v172 = vadd.s32 %v168, %v170
    %v173 = vadd.s32 %v172, %v162
    %v174 = vadd.s32 %v173, %v164
    %v175 = vmul.u32 %v130, %v121
    %v176 = vadd.s32 %v152, %v171
    %vm177 = vc.u32 %v152, %v171
    %v178 = vadd.s32 %v174, 1
    %v179 = vsel %vm177, %v178, %v174
    %v180 = vadd.s32 %v175, %v179
    %v181 = vadd.s32 %v180, 536870912
    %v182 = vshrl.u32 %v181, 30
    %v183 = vshll.u32 %v182, 30
    %v184 = vsub.s32 %v180, %v183
    %vm185 = vcmp.lt.s32.totalorder %v184, 0
    %v186 = vsub.s32 0, %v184
    %v187 = vsel %vm185, %v186, %v184
    %v188 = vclz %v187
    %v189 = vsub.s32 %v188, 2
    %vm190 = vcmp.gt.s32.totalorder 0, %v189
    %v191 = vsel %vm190, 0, %v189
    %v192 = vsub.s32 32, %v191
    %v193 = vshll.u32 %v184, %v191
    %v194 = vshrl.u32 %v176, %v192
    %v195 = vor.u32 %v193, %v194
    %v196 = vsub.s32 4294967266, %v191
    %v197 = vadd.s32 %v196, 127
    %v198 = vshll.u32 %v197, 23
    %v199 = vor.u32 4788187, %v198
    %v200 = vand.u32 2147483647, %v199
    %v202 = vcvt.s32.f32 %v195
    %v203 = vmul.f32 %v202, %v200
    %v204 = vxor.u32 %v203, 2147483648
    %v205 = vsel %vm84, %v204, %v203
    %v206 = vsub.s32 4, %v182
    %v207 = vsel %vm84, %v206, %v182
    %v208 = vsel %vm83, %v80, %v205
    %v209 = vsel %vm83, 0, %v207
    %v210 = vmul.f32 %v208, %v208
    %v211 = vmul.f32 %v210, -0.001358992
    %v212 = vadd.f32 %v211, 0.041655596
    %v213 = vmul.f32 %v210, %v212
    %v214 = vadd.f32 %v213, -0.4999988
    %v215 = vmul.f32 %v210, %v214
    %v216 = vadd.f32 1.0, %v215
    %v217 = vmul.f32 %v208, %v208
    %v218 = vmul.f32 %v217, -0.00019511016
    %v219 = vadd.f32 %v218, 0.008332121
    %v220 = vmul.f32 %v217, %v219
    %v221 = vadd.f32 %v220, -0.16666654
    %v222 = vmul.f32 %v217, %v221
    %v223 = vadd.f32 %v222, 1.0
    %v224 = vmul.f32 %v223, %v208
    %vm225 = vweird.f32 %v80
    %v226 = vadd.s32 %v209, 3
    %v227 = vand.u32 %v226, 3
    %vm228 = vcmp.lt.s32.totalorder %v227, 2
    %vm229 = vcmp.eq.s32.totalorder %v227, 0
    %v230 = vxor.u32 %v224, 2147483648
    %v231 = vsel %vm229, %v216, %v230
    %vm232 = vcmp.eq.s32.totalorder %v227, 2
    %v233 = vxor.u32 %v216, 2147483648
    %v234 = vsel %vm232, %v233, %v224
    %v235 = vsel %vm228, %v231, %v234
    %v236 = vsel %vm225, nan, %v235
    %v237 = vand.u32 2147483647, %v81
    %vm238 = vcmp.le.f32.partialorder %v237, 0.7853982
    %vm239 = vcmp.lt.s32.totalorder %v81, 0
    %v240 = vand.u32 %v81, 2139095040
    %v241 = vshrl.u32 %v240, 23
    %v242 = vsub.s32 %v241, 127
    %v243 = vand.u32 2147483647, %v81
    %v244 = vand.u32 %v243, 8388607
    %v245 = vor.u32 %v244, 8388608
    %v246 = vsub.s32 0, %v245
    %v247 = vadd.s32 %v242, 1
    %vm248 = vcmp.gt.s32.totalorder %v247, 0
    %v249 = vsel %vm248, %v247, 0
    %v250 = vshrl.u32 %v249, 5
    %v251 = vand.u32 %v249, 31
    %v252 = vsub.s32 32, %v251
    %v253 = vshrl.u32 683565275, %v252
    %v254 = vshll.u32 683565275, %v251
    %v255 = vshrl.u32 2475754826, %v252
    %v256 = vor.u32 %v254, %v255
    %v257 = vshll.u32 2475754826, %v251
    %v258 = vshrl.u32 2131351028, %v252
    %v259 = vor.u32 %v257, %v258
    %v260 = vshll.u32 2131351028, %v251
    %v261 = vshrl.u32 2102212464, %v252
    %v262 = vor.u32 %v260, %v261
    %v263 = vshll.u32 2102212464, %v251
    %v264 = vshrl.u32 920167782, %v252
    %v265 = vor.u32 %v263, %v264
    %v266 = vshll.u32 920167782, %v251
    %v267 = vshrl.u32 1326507024, %v252
    %v268 = vor.u32 %v266, %v267
    %vm269 = vcmp.lt.s32.totalorder %v250, 1
    %vm270 = vcmp.lt.s32.totalorder %v250, 2
    %vm271 = vcmp.lt.s32.totalorder %v250, 3
    %vm272 = vcmp.lt.s32.totalorder %v250, 4
    %v273 = vsel %vm269, %v253, %v256
    %v274 = vsel %vm272, %v262, 2102212464
    %v275 = vsel %vm271, %v259, %v274
    %v276 = vsel %vm270, %v273, %v275
    %v277 = vsel %vm269, %v256, %v259
    %v278 = vsel %vm272, %v265, 920167782
    %v279 = vsel %vm271, %v262, %v278
    %v280 = vsel %vm270, %v277, %v279
    %v281 = vsel %vm269, %v259, %v262
    %v282 = vsel %vm272, %v268, 1326507024
    %v283 = vsel %vm271, %v265, %v282
    %v284 = vsel %vm270, %v281, %v283
    %v285 = vshll.u32 %v245, 8
    %v286 = vand.u32 %v285, 65535
    %v287 = vshrl.u32 %v285, 16
    %v288 = vand.u32 %v284, 65535
    %v289 = vshrl.u32 %v284, 16
    %v290 = vmul.u32 %v286, %v288
    %v291 = vmul.u32 %v286, %v289
    %v292 = vmul.u32 %v287, %v288
    %v293 = vmul.u32 %v287, %v289
    %v294 = vshll.u32 %v291, 16
    %v295 = vshrl.u32 %v291, 16
    %v296 = vshll.u32 %v292, 16
    %v297 = vshrl.u32 %v292, 16
    %vm298 = vc.u32 %v290, %v294
    %v299 = vsel %vm298, 1, 0
    %v300 = vadd.s32 %v290, %v294
    %v301 = vadd.s32 %v293, %v299
    %vm302 = vc.u32 %v300, %v296
    %v303 = vsel %vm302, 1, 0
    %v304 = vadd.s32 %v300, %v296
    %v305 = vadd.s32 %v301, %v303
    %v306 = vadd.s32 %v305, %v295
    %v307 = vadd.s32 %v306, %v297
    %v308 = vand.u32 %v285, 65535
    %v309 = vshrl.u32 %v285, 16
    %v310 = vand.u32 %v280, 65535
    %v311 = vshrl.u32 %v280, 16
    %v312 = vmul.u32 %v308, %v310
    %v313 = vmul.u32 %v308, %v311
    %v314 = vmul.u32 %v309, %v310
    %v315 = vmul.u32 %v309, %v311
    %v316 = vshll.u32 %v313, 16
    %v317 = vshrl.u32 %v313, 16
    %v318 = vshll.u32 %v314, 16
    %v319 = vshrl.u32 %v314, 16
    %vm320 = vc.u32 %v312, %v316
    %v321 = vsel %vm320, 1, 0
    %v322 = vadd.s32 %v312, %v316
    %v323 = vadd.s32 %v315, %v321
    %vm324 = vc.u32 %v322, %v318
    %v325 = vsel %vm324, 1, 0
    %v326 = vadd.s32 %v322, %v318
    %v327 = vadd.s32 %v323, %v325
    %v328 = vadd.s32 %v327, %v317
    %v329 = vadd.s32 %v328, %v319
    %v330 = vmul.u32 %v285, %v276
    %v331 = vadd.s32 %v307, %v326
    %vm332 = vc.u32 %v307, %v326
    %v333 = vadd.s32 %v329, 1
    %v334 = vsel %vm332, %v333, %v329
    %v335 = vadd.s32 %v330, %v334
    %v336 = vadd.s32 %v335, 536870912
    %v337 = vshrl.u32 %v336, 30
    %v338 = vshll.u32 %v337, 30
    %v339 = vsub.s32 %v335, %v338
    %vm340 = vcmp.lt.s32.totalorder %v339, 0
    %v341 = vsub.s32 0, %v339
    %v342 = vsel %vm340, %v341, %v339
    %v343 = vclz %v342
    %v344 = vsub.s32 %v343, 2
    %vm345 = vcmp.gt.s32.totalorder 0, %v344
    %v346 = vsel %vm345, 0, %v344
    %v347 = vsub.s32 32, %v346
    %v348 = vshll.u32 %v339, %v346
    %v349 = vshrl.u32 %v331, %v347
    %v350 = vor.u32 %v348, %v349
    %v351 = vsub.s32 4294967266, %v346
    %v352 = vadd.s32 %v351, 127
    %v353 = vshll.u32 %v352, 23
    %v354 = vor.u32 4788187, %v353
    %v355 = vand.u32 2147483647, %v354
    %v357 = vcvt.s32.f32 %v350
    %v358 = vmul.f32 %v357, %v355
    %v359 = vxor.u32 %v358, 2147483648
    %v360 = vsel %vm239, %v359, %v358
    %v361 = vsub.s32 4, %v337
    %v362 = vsel %vm239, %v361, %v337
    %v363 = vsel %vm238, %v81, %v360
    %v364 = vsel %vm238, 0, %v362
    %v365 = vmul.f32 %v363, %v363
    %v366 = vmul.f32 %v365, -0.001358992
    %v367 = vadd.f32 %v366, 0.041655596
    %v368 = vmul.f32 %v365, %v367
    %v369 = vadd.f32 %v368, -0.4999988
    %v370 = vmul.f32 %v365, %v369
    %v371 = vadd.f32 1.0, %v370
    %v372 = vmul.f32 %v363, %v363
    %v373 = vmul.f32 %v372, -0.00019511016
    %v374 = vadd.f32 %v373, 0.008332121
    %v375 = vmul.f32 %v372, %v374
    %v376 = vadd.f32 %v375, -0.16666654
    %v377 = vmul.f32 %v372, %v376
    %v378 = vadd.f32 %v377, 1.0
    %v379 = vmul.f32 %v378, %v363
    %vm380 = vweird.f32 %v81
    %v381 = vadd.s32 %v364, 3
    %v382 = vand.u32 %v381, 3
    %vm383 = vcmp.lt.s32.totalorder %v382, 2
    %vm384 = vcmp.eq.s32.totalorder %v382, 0
    %v385 = vxor.u32 %v379, 2147483648
    %v386 = vsel %vm384, %v371, %v385
    %vm387 = vcmp.eq.s32.totalorder %v382, 2
    %v388 = vxor.u32 %v371, 2147483648
    %v389 = vsel %vm387, %v388, %v379
    %v390 = vsel %vm383, %v386, %v389
    %v391 = vsel %vm380, nan, %v390
    %392 = vst [vmem:[#allocation2] sm:$0xff] %v236
    %393 = vst [vmem:[#allocation2 + $0x8] sm:$0xff] %v391
    // Predicated region
    $region6: #{tpu_custom_call.1} parent=1 // pred_check
      _
    $region7: #{tpu_custom_call.1} parent=1 // pred_check_branch
      %395 = sbr.rel (0) target = $region9
    $region8: #{tpu_custom_call.1} parent=1 // pred_region
      %397 = vsyncadd [#allocation3], 0
      %s398 = sshll.u32 [#allocation2], 4
      %s399 = int_to_ptr.vmem [resolvable:$true] %s398
      %s400 = sshll.u32 %s1, 4
      %s401 = int_to_ptr.hbm [resolvable:$true] %s400
      %406 = dma.vmem_to_hbm [thread:$0]  %s399, 256, %s401, [#allocation3], 128, 128, 8
    $region9: #{tpu_custom_call.1} parent=1 // pred_fallthru
      _
    // Predicated region
    $region10: #{tpu_custom_call.1} parent=1 // pred_check
      _
    $region11: #{tpu_custom_call.1} parent=1 // pred_check_branch
      %408 = sbr.rel (0) target = $region13
    $region12: #{tpu_custom_call.1} parent=1 // pred_region
      %410 = dma.done [#allocation3], 256
    $region13: #{tpu_custom_call.1} parent=1 // pred_fallthru
      _
    %411 = vsyncpa [#allocation3], 1

</llo_original>
